<compile_context>
chip_gen: v7x
topology: tpu7x:2x2x1
jax: 0.10.0
libtpu: 0.0.40
codegen_flags: <defaults>
</compile_context>

<pallas_src>
import jax
import jax.numpy as jnp
from jax.experimental import pallas as pl
from jax.experimental.pallas import tpu as pltpu

_LANE = 128
_SUBLANE = 8


def _round_up(v: int, m: int) -> int:
    return ((v + m - 1) // m) * m


def _cdiv(a: int, b: int) -> int:
    return (a + b - 1) // b


def dense_layer_kernel(x_ref, wt_ref, b_ref, o_ref):
    # MXU matmul: bf16 operands (cast hoisted to the wrapper), f32 accumulate.
    z = jnp.dot(x_ref[...], wt_ref[...], preferred_element_type=jnp.float32)
    # f32 VPU epilogue: bias broadcast-add + ReLU (padded bias cols are 0).
    o_ref[...] = jnp.maximum(z + b_ref[...], 0.0).astype(o_ref.dtype)


def prepare_dense_params(w, b):
    """One-time parameter prep (hoisted out of the per-call path).

    w: (out_features, in_features) nn.Linear layout; b: (out_features,).
    Returns zero-padded, transposed bf16 weights and a (1, Hp) f32 bias row.
    """
    H, S = w.shape
    Kp = _round_up(S, _LANE)
    Hp = _round_up(H, _LANE)
    wt = jnp.zeros((Kp, Hp), jnp.bfloat16).at[:S, :H].set(w.T.astype(jnp.bfloat16))
    br = jnp.zeros((1, Hp), jnp.float32).at[0, :H].set(b.astype(jnp.float32))
    return {"wt": wt, "b": br, "in_features": int(S), "out_features": int(H)}


def _choose_tn(Kp: int, Hp: int, tm: int, budget_bytes: int) -> int:
    """Largest output-feature tile (multiple of 128 dividing Hp) whose working
    set (weight slab(s) + 2x bf16 x tile + 2x f32 out tile + bias) fits."""
    n_lane_blocks = Hp // _LANE
    for nt in range(1, n_lane_blocks + 1):
        if n_lane_blocks % nt:
            continue
        tn = Hp // nt
        wt_bufs = 1 if nt == 1 else 2      # invariant slab -> single buffer
        need = (Kp * tn * 2) * wt_bufs          # bf16 weight slab(s)
        need += 2 * tm * Kp * 2                 # double-buffered bf16 x tile
        need += 2 * tm * tn * 4                 # double-buffered f32 out tile
        need += wt_bufs * tn * 4                # bias row(s)
        if need <= budget_bytes:
            return tn
    return _LANE  # smallest slab; see K-tiling TODO above


def dense_layer_apply(x, params, *, tm_max: int = 512,
                      vmem_budget_bytes: int = 48 << 20):
    """x: (B, in_features) f32 -> (B, out_features) f32 = relu(x @ W.T + b)."""
    wt = params["wt"]            # (Kp, Hp) bf16
    b2d = params["b"]            # (1, Hp) f32
    S = params["in_features"]
    H = params["out_features"]
    Kp, Hp = wt.shape
    B = x.shape[0]

    # Batch tile: minimize pad waste (<= 7 pad rows) while capping at tm_max.
    n_bt = max(1, _cdiv(B, tm_max))
    tm = _round_up(_cdiv(B, n_bt), _SUBLANE)
    Bp = _round_up(B, tm)

    # Output-feature tile: keep the weight slab within the VMEM budget.
    tn = _choose_tn(Kp, Hp, tm, vmem_budget_bytes)
    n_tiles = Hp // tn
    single_n = n_tiles == 1

    # Pad + cast activations to bf16 in the wrapper; skip the extra pad pass
    # entirely when the input is already aligned.
    if (Bp, Kp) == (B, S):
        xp = x.astype(jnp.bfloat16)
    else:
        xp = jnp.zeros((Bp, Kp), jnp.bfloat16).at[:B, :S].set(
            x.astype(jnp.bfloat16))

    # Grid: output-feature slabs outer, batch tiles inner -> each weight slab
    # is DMA'd from HBM exactly once and reused across all batch tiles.
    grid = (n_tiles, Bp // tm)

    if single_n:
        # Grid-invariant operands: single-buffer (halves resident-weight VMEM).
        wt_spec = pl.BlockSpec((Kp, tn), lambda n, i: (0, 0),
                               pipeline_mode=pl.Buffered(1))
        b_spec = pl.BlockSpec((1, tn), lambda n, i: (0, 0),
                              pipeline_mode=pl.Buffered(1))
        wt_bufs = 1
    else:
        wt_spec = pl.BlockSpec((Kp, tn), lambda n, i: (n, 0))
        b_spec = pl.BlockSpec((1, tn), lambda n, i: (0, n))
        wt_bufs = 2

    # Explicit VMEM budget: working set + headroom, capped at 64 MiB (v7x).
    need = ((Kp * tn * 2) * wt_bufs + 2 * tm * Kp * 2 + 2 * tm * tn * 4
            + wt_bufs * tn * 4)
    vmem_limit = int(min(need + (16 << 20), 64 << 20))

    bytes_accessed = (xp.size * 2 * n_tiles + wt.size * 2 + b2d.size * 4
                      + Bp * Hp * 4)
    cost = pl.CostEstimate(flops=2 * Bp * Kp * Hp, transcendentals=0,
                           bytes_accessed=int(bytes_accessed))

    out = pl.pallas_call(
        dense_layer_kernel,
        out_shape=jax.ShapeDtypeStruct((Bp, Hp), jnp.float32),
        grid_spec=pltpu.PrefetchScalarGridSpec(
            num_scalar_prefetch=0,
            grid=grid,
            in_specs=[
                pl.BlockSpec((tm, Kp), lambda n, i: (i, 0)),  # x: batch-tiled
                wt_spec,                                       # W.T slab
                b_spec,                                        # bias slab
            ],
            out_specs=pl.BlockSpec((tm, tn), lambda n, i: (i, n)),
        ),
        compiler_params=pltpu.CompilerParams(
            # Both axes independent (no reduction axis); batch/feature tiles
            # can shard across TensorCores on multi-core parts.
            dimension_semantics=("parallel", "parallel"),
            vmem_limit_bytes=vmem_limit,
        ),
        cost_estimate=cost,
    )(xp, wt, b2d)

    if (Bp, Hp) != (B, H):
        out = out[:B, :H]
    return out


def _init_linear(key, out_features, in_features):
    # Deterministic init mimicking torch.nn.Linear (uniform(+-1/sqrt(in))).
    kw, kb = jax.random.split(key)
    bound = 1.0 / jnp.sqrt(jnp.float32(in_features))
    w = jax.random.uniform(kw, (out_features, in_features), jnp.float32,
                           -bound, bound)
    b = jax.random.uniform(kb, (out_features,), jnp.float32, -bound, bound)
    return w, b


if __name__ == "__main__":
    # Small shapes consistent with DenseLayer.forward (x: (batch, in_features)).
    B, in_features, out_features = 8, 16, 32

    key = jax.random.PRNGKey(0)
    kx, kparams = jax.random.split(key)

    x = jax.random.normal(kx, (B, in_features), jnp.float32)
    w, b = _init_linear(kparams, out_features, in_features)

    params = prepare_dense_params(w, b)       # one-time prep (hoisted)
    out = jax.block_until_ready(dense_layer_apply(x, params))

    # Full-f32 module semantics; tolerance admits bf16 MXU operands.
    ref = jnp.maximum(x @ w.T + b, 0.0)
    assert out.shape == (B, out_features)
    assert jnp.allclose(out, ref, atol=2e-2, rtol=2e-2), \
        float(jnp.max(jnp.abs(out - ref)))
    print("KERNEL_OK")
</pallas_src>

<mosaic_0001>
module attributes {stable_mosaic.version = 11 : i64} {
  func.func @dense_layer_kernel(%arg0: i32, %arg1: i32, %arg2: memref<8x128xbf16, #tpu.memory_space<vmem>>, %arg3: memref<128x128xbf16, #tpu.memory_space<vmem>>, %arg4: memref<1x128xf32, #tpu.memory_space<vmem>>, %arg5: memref<8x128xf32, #tpu.memory_space<vmem>>) attributes {dimension_semantics = [#tpu.dimension_semantics<parallel>, #tpu.dimension_semantics<parallel>], iteration_bounds = array<i64: 1, 1>, scalar_prefetch = 0 : i64, scratch_operands = 0 : i64, tpu.core_type = #tpu.core_type<tc>, window_params = [{transform_indices = @transform_0, window_bounds = array<i64: 8, 128>}, {pipeline_mode = #tpu.pipeline_mode<synchronous>, transform_indices = @transform_1, window_bounds = array<i64: 128, 128>}, {pipeline_mode = #tpu.pipeline_mode<synchronous>, transform_indices = @transform_2, window_bounds = array<i64: 1, 128>}, {transform_indices = @transform_3, window_bounds = array<i64: 8, 128>}]} {
    %c0 = arith.constant 0 : index
    %c0_0 = arith.constant 0 : index
    %0 = vector.load %arg2[%c0, %c0_0] : memref<8x128xbf16, #tpu.memory_space<vmem>>, vector<8x128xbf16>
    %c0_1 = arith.constant 0 : index
    %c0_2 = arith.constant 0 : index
    %1 = vector.load %arg3[%c0_1, %c0_2] : memref<128x128xbf16, #tpu.memory_space<vmem>>, vector<128x128xbf16>
    %cst = arith.constant dense<0.000000e+00> : vector<8x128xf32>
    %2 = tpu.matmul %0, %1, %cst {dimension_numbers = #tpu.dot_dimension_numbers<[1], [0], [0], [1], [0, 0, 1, 1], [], []>} : vector<8x128xbf16>, vector<128x128xbf16>, vector<8x128xf32> -> vector<8x128xf32>
    %c0_3 = arith.constant 0 : index
    %c0_4 = arith.constant 0 : index
    %3 = vector.load %arg4[%c0_3, %c0_4] : memref<1x128xf32, #tpu.memory_space<vmem>>, vector<1x128xf32>
    %4 = vector.broadcast %3 : vector<1x128xf32> to vector<8x128xf32>
    %5 = arith.addf %2, %4 : vector<8x128xf32>
    %cst_5 = arith.constant 0.000000e+00 : f32
    %6 = vector.broadcast %cst_5 : f32 to vector<8x128xf32>
    %7 = arith.maximumf %5, %6 : vector<8x128xf32>
    %c0_6 = arith.constant 0 : index
    %c0_7 = arith.constant 0 : index
    %8 = vector.load %arg5[%c0_6, %c0_7] : memref<8x128xf32, #tpu.memory_space<vmem>>, vector<8x128xf32>
    tpu.vector_store %arg5[%c0_6, %c0_7], %7 {strides = array<i32>} : memref<8x128xf32, #tpu.memory_space<vmem>>, vector<8x128xf32>,
    return
  }
  func.func @transform_0(%arg0: i32, %arg1: i32) -> (i32, i32) {
    %c0_i32 = arith.constant 0 : i32
    %c0_i32_0 = arith.constant 0 : i32
    return %arg1, %c0_i32 : i32, i32
  }
  func.func @transform_1(%arg0: i32, %arg1: i32) -> (i32, i32) {
    %c0_i32 = arith.constant 0 : i32
    %c0_i32_0 = arith.constant 0 : i32
    %c0_i32_1 = arith.constant 0 : i32
    return %c0_i32, %c0_i32_0 : i32, i32
  }
  func.func @transform_2(%arg0: i32, %arg1: i32) -> (i32, i32) {
    %c0_i32 = arith.constant 0 : i32
    %c0_i32_0 = arith.constant 0 : i32
    %c0_i32_1 = arith.constant 0 : i32
    return %c0_i32, %c0_i32_0 : i32, i32
  }
  func.func @transform_3(%arg0: i32, %arg1: i32) -> (i32, i32) {
    %c0_i32 = arith.constant 0 : i32
    return %arg1, %arg0 : i32, i32
  }
}

</mosaic_0001>

<llo_original>
// kernel: tpu_custom_call.1
$region0: #{tpu_custom_call.1}
  #allocation0 [shape = 'u32[]', space=smem, size = 0x4, offset = 0x4, fixed_abs, tag = 'smem constant byte address 0x4 - core index']
  #allocation1 [shape = 'u32[144,128]{1,0:T(1,128)}', space=vmem, size = 0x12000, scoped, tag = 'internal scratch']
  %s0 = inlined_call_operand.hbm [shape: bf16[8,128], index: 0, kind: input, shape index: {}]
  %s1 = inlined_call_operand.hbm [shape: bf16[128,128], index: 1, kind: input, shape index: {}]
  %s2 = inlined_call_operand.vmem [shape: f32[1,128], index: 2, kind: input, shape index: {}]
  %s3 = inlined_call_operand.hbm [shape: f32[8,128], index: 3, kind: output, shape index: {}]
  %s4 = sld [smem:[#allocation0]]
  $region30: #{tpu_custom_call.1} parent=0
    _
  %s6 = ssub.s32 1, %s4
  %s7 = scalar_select 0, %s6, %s4
  $region1: #{tpu_custom_call.1} parent=0
    #allocation2 [shape = 'u8[2048]{0}', space=vmem, size = 0x800, scoped, tag = 'input window, operand 0, single buffered']
    #allocation3 [shape = 's32[1]{0}', space=sflag, size = 0x4, scoped, tag = 'scoped memory for tpu_custom_call.1']
    #allocation4 [shape = 's32[1]{0}', space=sflag, size = 0x4, scoped, tag = 'scoped memory for tpu_custom_call.1']
    #allocation5 [shape = 'u8[32768]{0}', space=vmem, size = 0x8000, scoped, tag = 'input window, operand 1, single buffered']
    #allocation6 [shape = 's32[1]{0}', space=sflag, size = 0x4, scoped, tag = 'scoped memory for tpu_custom_call.1']
    #allocation7 [shape = 'u8[4096]{0}', space=vmem, size = 0x1000, scoped, tag = 'output window, operand 0, single buffered']
    %8 = vsyncpa [#allocation3], 0
    %9 = vsyncpa [#allocation6], 0
    %10 = vsyncpa [#allocation4], 0
    // Predicated region
    $region2: #{tpu_custom_call.1} parent=1 // pred_check
      _
    $region3: #{tpu_custom_call.1} parent=1 // pred_check_branch
      %12 = sbr.rel (0) target = $region5
    $region4: #{tpu_custom_call.1} parent=1 // pred_region
      %s14 = ssub.s32 64, 64
      %15 = vsyncadd [#allocation3], %s14
      %s17 = sshll.u32 [#allocation2], 4
      %s18 = int_to_ptr.vmem [resolvable:$true] %s17
      %20 = dma.hbm_to_vmem [thread:$0]  %s0, 64, %s18, [#allocation3]
    $region5: #{tpu_custom_call.1} parent=1 // pred_fallthru
      _
    // Predicated region
    $region6: #{tpu_custom_call.1} parent=1 // pred_check
      _
    $region7: #{tpu_custom_call.1} parent=1 // pred_check_branch
      %22 = sbr.rel (0) target = $region9
    $region8: #{tpu_custom_call.1} parent=1 // pred_region
      %s24 = ssub.s32 1024, 1024
      %25 = vsyncadd [#allocation6], %s24
      %s26 = sshll.u32 [#allocation5], 4
      %s27 = int_to_ptr.vmem [resolvable:$true] %s26
      %32 = dma.hbm_to_vmem [thread:$0]  %s1, 1024, %s27, [#allocation6], 64, 64, 4
    $region9: #{tpu_custom_call.1} parent=1 // pred_fallthru
      _
    // Predicated region
    $region10: #{tpu_custom_call.1} parent=1 // pred_check
      _
    $region11: #{tpu_custom_call.1} parent=1 // pred_check_branch
      %34 = sbr.rel (0) target = $region13
    $region12: #{tpu_custom_call.1} parent=1 // pred_region
      _
    $region13: #{tpu_custom_call.1} parent=1 // pred_fallthru
      _
    // Predicated region
    $region14: #{tpu_custom_call.1} parent=1 // pred_check
      _
    $region15: #{tpu_custom_call.1} parent=1 // pred_check_branch
      %36 = sbr.rel (0) target = $region17
    $region16: #{tpu_custom_call.1} parent=1 // pred_region
      %37 = dma.done [#allocation3], 64
    $region17: #{tpu_custom_call.1} parent=1 // pred_fallthru
      _
    // Predicated region
    $region18: #{tpu_custom_call.1} parent=1 // pred_check
      _
    $region19: #{tpu_custom_call.1} parent=1 // pred_check_branch
      %39 = sbr.rel (0) target = $region21
    $region20: #{tpu_custom_call.1} parent=1 // pred_region
      %40 = dma.done [#allocation6], 1024
    $region21: #{tpu_custom_call.1} parent=1 // pred_fallthru
      _
    %v42 = vld [vmem:[#allocation2] sm:$0xf]
    %v43 = vld [vmem:[#allocation5] sm:$0xf]
    %v44 = vld [vmem:[#allocation5 + $0x4] sm:$0xf]
    %v45 = vld [vmem:[#allocation5 + $0x8] sm:$0xf]
    %v46 = vld [vmem:[#allocation5 + $0xc] sm:$0xf]
    %v47 = vld [vmem:[#allocation5 + $0x10] sm:$0xf]
    %v48 = vld [vmem:[#allocation5 + $0x14] sm:$0xf]
    %v49 = vld [vmem:[#allocation5 + $0x18] sm:$0xf]
    %v50 = vld [vmem:[#allocation5 + $0x1c] sm:$0xf]
    %v51 = vld [vmem:[#allocation5 + $0x20] sm:$0xf]
    %v52 = vld [vmem:[#allocation5 + $0x24] sm:$0xf]
    %v53 = vld [vmem:[#allocation5 + $0x28] sm:$0xf]
    %v54 = vld [vmem:[#allocation5 + $0x2c] sm:$0xf]
    %v55 = vld [vmem:[#allocation5 + $0x30] sm:$0xf]
    %v56 = vld [vmem:[#allocation5 + $0x34] sm:$0xf]
    %v57 = vld [vmem:[#allocation5 + $0x38] sm:$0xf]
    %v58 = vld [vmem:[#allocation5 + $0x3c] sm:$0xf]
    %v59 = vld [vmem:[%s2] sm:$0x1]
    %v61 = vlaneseq
    %v62 = vshrl.u32 %v61, 7
    %v63 = vsub.s32 0, %v62
    %v64 = vrot.slane %v59, %v63
    %v82 = vunpack.c.l.b16 %v43
    %v83 = vunpack.c.l.b16 %v44
    %v84 = vunpack.c.l.b16 %v45
    %v85 = vunpack.c.l.b16 %v46
    %v86 = vunpack.c.l.b16 %v47
    %v87 = vunpack.c.l.b16 %v48
    %v88 = vunpack.c.l.b16 %v49
    %v89 = vunpack.c.l.b16 %v50
    %v90 = vunpack.c.l.b16 %v51
    %v91 = vunpack.c.l.b16 %v52
    %v92 = vunpack.c.l.b16 %v53
    %v93 = vunpack.c.l.b16 %v54
    %v94 = vunpack.c.l.b16 %v55
    %v95 = vunpack.c.l.b16 %v56
    %v96 = vunpack.c.l.b16 %v57
    %v97 = vunpack.c.l.b16 %v58
    %v98 = vpack.c.b16 %v83, %v82
    %v99 = vpack.c.b16 %v85, %v84
    %v100 = vpack.c.b16 %v87, %v86
    %v101 = vpack.c.b16 %v89, %v88
    %v102 = vpack.c.b16 %v91, %v90
    %v103 = vpack.c.b16 %v93, %v92
    %v104 = vpack.c.b16 %v95, %v94
    %v105 = vpack.c.b16 %v97, %v96
    %114 = vmatprep.subr.bf16.mxu0 0
    %115 = vmatpush1.bf16.msra.mxu0 %v98
    %116 = vmatprep.subr.bf16.mxu0 0
    %117 = vmatpush1.bf16.msra.mxu0 %v99
    %118 = vmatprep.subr.bf16.mxu0 0
    %119 = vmatpush1.bf16.msra.mxu0 %v100
    %120 = vmatprep.subr.bf16.mxu0 0
    %121 = vmatpush1.bf16.msra.mxu0 %v101
    %122 = vmatprep.subr.bf16.mxu0 0
    %123 = vmatpush1.bf16.msra.mxu0 %v102
    %124 = vmatprep.subr.bf16.mxu0 0
    %125 = vmatpush1.bf16.msra.mxu0 %v103
    %126 = vmatprep.subr.bf16.mxu0 0
    %127 = vmatpush1.bf16.msra.mxu0 %v104
    %128 = vmatprep.subr.bf16.mxu0 0
    %129 = vmatpush1.bf16.msra.mxu0 %v105
    %130 = vmatprep.subr.bf16.mxu0 0
    %131 = vmatpush1.bf16.msra.mxu0 0
    %132 = vmatprep.subr.bf16.mxu0 0
    %133 = vmatpush1.bf16.msra.mxu0 0
    %134 = vmatprep.subr.bf16.mxu0 0
    %135 = vmatpush1.bf16.msra.mxu0 0
    %136 = vmatprep.subr.bf16.mxu0 0
    %137 = vmatpush1.bf16.msra.mxu0 0
    %138 = vmatprep.subr.bf16.mxu0 0
    %139 = vmatpush1.bf16.msra.mxu0 0
    %140 = vmatprep.subr.bf16.mxu0 0
    %141 = vmatpush1.bf16.msra.mxu0 0
    %142 = vmatprep.subr.bf16.mxu0 0
    %143 = vmatpush1.bf16.msra.mxu0 0
    %144 = vmatprep.subr.bf16.mxu0 0
    %145 = vmatpush1.bf16.msra.mxu0 0
    %146 = vmatprep.mubr.bf16.mxu0 0
    %147 = vmatmul.mubr.bf16.gmra.mrb[0].mxu0 %v42
    %v148 = vpop.f32.mrb[0].mxu0
    %v149 = vadd.f32 %v64, %v148
    %v150 = vpop.f32.mrb[0].mxu0
    %v151 = vpop.f32.mrb[0].mxu0
    %v152 = vpop.f32.mrb[0].mxu0
    %153 = vdwg.mxu0
    %v154 = vmax.f32 %v149, 0.0
    %155 = vst [vmem:[#allocation7] sm:$0xff] %v154
    // Predicated region
    $region22: #{tpu_custom_call.1} parent=1 // pred_check
      _
    $region23: #{tpu_custom_call.1} parent=1 // pred_check_branch
      %157 = sbr.rel (0) target = $region25
    $region24: #{tpu_custom_call.1} parent=1 // pred_region
      %s159 = ssub.s32 128, 128
      %160 = vsyncadd [#allocation4], %s159
      %s162 = sshll.u32 [#allocation7], 4
      %s163 = int_to_ptr.vmem [resolvable:$true] %s162
      %165 = dma.vmem_to_hbm [thread:$0]  %s163, 128, %s3, [#allocation4]
    $region25: #{tpu_custom_call.1} parent=1 // pred_fallthru
      _
    // Predicated region
    $region26: #{tpu_custom_call.1} parent=1 // pred_check
      _
    $region27: #{tpu_custom_call.1} parent=1 // pred_check_branch
      %167 = sbr.rel (0) target = $region29
    $region28: #{tpu_custom_call.1} parent=1 // pred_region
      %168 = dma.done [#allocation4], 128
    $region29: #{tpu_custom_call.1} parent=1 // pred_fallthru
      _
    %169 = vsyncpa [#allocation3], 1
    %170 = vsyncpa [#allocation6], 1
    %171 = vsyncpa [#allocation4], 1

</llo_original>
